<compile_context>
chip_gen: v7x
topology: tpu7x:2x2x1
jax: 0.10.0
libtpu: 0.0.40
codegen_flags: <defaults>
</compile_context>

<pallas_src>
import functools

import jax
import jax.numpy as jnp
import numpy as np
from jax.experimental import pallas as pl
from jax.experimental.pallas import tpu as pltpu


def _vmem_capacity_bytes():
    """Physical VMEM of the local TPU generation (fallback: v7x-sized 64 MiB)."""
    try:
        cap = getattr(pltpu.get_tpu_info(), "vmem_capacity_bytes", None)
        if cap:
            return int(cap)
    except Exception:
        pass
    return 64 << 20  # conservative (smallest current generation)


# ---------------------------------------------------------------------------
# Fused single-pass kernel: pool + k=3 channel conv + sigmoid + gate,
# one (C, HW) slab (one batch element) per grid step.
# ---------------------------------------------------------------------------
def _eca_fused_kernel(w_ref, x_ref, o_ref, *, inv_hw, c):
    # w_ref: SMEM f32[3]     -- Conv1d(1, 1, k=3, bias=False) taps
    # x_ref/o_ref: VMEM (1, C, HW) blocks (f32 or bf16)
    x = x_ref[0]                                                      # (C, HW)

    # Global average pool; f32 accumulation fused into the reduce (no widened
    # f32 copy of the streamed slab).
    m = jnp.sum(x, axis=-1, dtype=jnp.float32, keepdims=True) * inv_hw   # (C, 1)

    # k=3 zero-padded channel conv on the O(C) pooled column:
    #   y[c] = w0*m[c-1] + w1*m[c] + w2*m[c+1]
    # Implemented with a zero-padded column + static slices (tiny epilogue vs.
    # the O(C*HW) HBM stream; vanilla ops -> robust lowering).
    zero = jnp.zeros((1, 1), jnp.float32)
    mp = jnp.concatenate([zero, m, zero], axis=0)                     # (C+2, 1)
    y = w_ref[0] * mp[0:c] + w_ref[1] * m + w_ref[2] * mp[2:c + 2]
    scale = jax.nn.sigmoid(y)                                         # (C, 1) f32

    # Channel-wise gating in the I/O dtype (bf16 stays bf16 -- HBM-bound).
    o_ref[0] = (x * scale.astype(x.dtype)).astype(o_ref.dtype)


def _eca_fused(x2, conv_w, *, phys_vmem):
    B, C, HW = x2.shape
    itemsize = jnp.dtype(x2.dtype).itemsize
    slab_bytes = C * HW * itemsize
    vmem_bytes = int(min(max(4 * slab_bytes + (2 << 20), 16 << 20),
                         phys_vmem // 2))
    cost = pl.CostEstimate(
        flops=2 * B * C * HW + 8 * B * C,        # pool adds + gate muls + conv
        transcendentals=B * C,                    # sigmoid
        bytes_accessed=2 * B * C * HW * itemsize + 3 * 4,
    )
    return pl.pallas_call(
        functools.partial(_eca_fused_kernel, inv_hw=1.0 / HW, c=C),
        out_shape=jax.ShapeDtypeStruct((B, C, HW), x2.dtype),
        grid_spec=pl.GridSpec(
            grid=(B,),
            in_specs=[
                pl.BlockSpec(memory_space=pltpu.MemorySpace.SMEM),    # conv taps
                pl.BlockSpec((1, C, HW), lambda b: (b, 0, 0)),        # x slab
            ],
            out_specs=pl.BlockSpec((1, C, HW), lambda b: (b, 0, 0)),
        ),
        compiler_params=pltpu.CompilerParams(
            dimension_semantics=("parallel",),
            vmem_limit_bytes=vmem_bytes,
        ),
        cost_estimate=cost,
    )(conv_w, x2)


# ---------------------------------------------------------------------------
# Split path: C-tiled pooling kernel -> tiny JAX conv+sigmoid -> C-tiled
# gating kernel.  Bounded VMEM and many grid steps (v7x / big feature maps).
# ---------------------------------------------------------------------------
def _eca_pool_kernel(x_ref, m_ref, *, inv_hw):
    m_ref[0] = (jnp.sum(x_ref[0], axis=-1, dtype=jnp.float32, keepdims=True)
                * inv_hw)


def _eca_gate_kernel(x_ref, s_ref, o_ref):
    x = x_ref[0]                                   # (C_t, HW)
    o_ref[0] = (x * s_ref[0].astype(x.dtype)).astype(o_ref.dtype)


def _choose_c_tile(C, HW, itemsize, target_bytes=1 << 20):
    # Multiple-of-8 divisor of C sized for ~0.5-2 MiB lane-dense blocks.
    if C % 8 != 0:
        return C                                   # full-C block (legal: == dim)
    cands = [d for d in range(8, C + 1, 8) if C % d == 0]
    fitting = [d for d in cands if d * HW * itemsize <= target_bytes]
    return max(fitting) if fitting else min(cands)
    # TODO(synk): also tile HW (with in-kernel partial-sum accumulation) for
    # extreme spatial sizes where even an 8-channel block exceeds ~2 MiB.


def _eca_split(x2, conv_w, *, phys_vmem, c_tile=None):
    B, C, HW = x2.shape
    itemsize = jnp.dtype(x2.dtype).itemsize
    if c_tile is None:
        c_tile = _choose_c_tile(C, HW, itemsize)
    if C % c_tile != 0:
        raise ValueError("c_tile must divide C")
    n_ct = C // c_tile
    tile_bytes = c_tile * HW * itemsize
    vmem_bytes = int(min(max(6 * tile_bytes + (2 << 20), 16 << 20),
                         phys_vmem // 2))
    dimsem = ("parallel", "parallel")

    # (1) Pooling kernel: per-(batch, channel-tile) f32 means.
    pooled = pl.pallas_call(
        functools.partial(_eca_pool_kernel, inv_hw=1.0 / HW),
        out_shape=jax.ShapeDtypeStruct((B, C, 1), jnp.float32),
        grid_spec=pl.GridSpec(
            grid=(B, n_ct),
            in_specs=[pl.BlockSpec((1, c_tile, HW), lambda b, ct: (b, ct, 0))],
            out_specs=pl.BlockSpec((1, c_tile, 1), lambda b, ct: (b, ct, 0)),
        ),
        compiler_params=pltpu.CompilerParams(
            dimension_semantics=dimsem, vmem_limit_bytes=vmem_bytes),
        cost_estimate=pl.CostEstimate(
            flops=B * C * HW, transcendentals=0,
            bytes_accessed=B * C * HW * itemsize + B * C * 4),
    )(x2)

    # (2) k=3 channel conv + sigmoid on the tiny (B, C) pooled vector
    #     (plain JAX; naturally lane-major).
    means = pooled[:, :, 0]                                      # (B, C) f32
    mpad = jnp.pad(means, ((0, 0), (1, 1)))
    y = (conv_w[0] * mpad[:, :-2] + conv_w[1] * mpad[:, 1:-1]
         + conv_w[2] * mpad[:, 2:])
    scale = jax.nn.sigmoid(y)[:, :, None]                        # (B, C, 1) f32

    # (3) Gating kernel: lane-dense (C_t, HW) blocks; per-channel scale as a
    #     small VMEM operand.
    # TODO(synk): sweep pipeline_mode=pl.Buffered(2..3) on the x BlockSpec on
    # v7x if traces show exposed copy time.
    out = pl.pallas_call(
        _eca_gate_kernel,
        out_shape=jax.ShapeDtypeStruct((B, C, HW), x2.dtype),
        grid_spec=pl.GridSpec(
            grid=(B, n_ct),
            in_specs=[
                pl.BlockSpec((1, c_tile, HW), lambda b, ct: (b, ct, 0)),
                pl.BlockSpec((1, c_tile, 1), lambda b, ct: (b, ct, 0)),
            ],
            out_specs=pl.BlockSpec((1, c_tile, HW), lambda b, ct: (b, ct, 0)),
        ),
        compiler_params=pltpu.CompilerParams(
            dimension_semantics=dimsem, vmem_limit_bytes=vmem_bytes),
        cost_estimate=pl.CostEstimate(
            flops=B * C * HW, transcendentals=0,
            bytes_accessed=2 * B * C * HW * itemsize + B * C * 4),
    )(x2, scale)
    return out


def eca_forward(x, conv_w, *, force_path=None, c_tile=None):
    """ECA forward. x: (B, C, H, W) f32/bf16; conv_w: (3,) Conv1d(1,1,3) taps."""
    B, C, H, W = x.shape
    HW = H * W
    conv_w = conv_w.astype(jnp.float32)
    x2 = x.reshape(B, C, HW)                 # contiguous view; NO spatial pad

    itemsize = jnp.dtype(x.dtype).itemsize
    slab_bytes = C * HW * itemsize
    phys_vmem = _vmem_capacity_bytes()
    # Fused path double-buffers one input + one output slab; keep well under
    # the device's physical VMEM (generation-aware: 64 MiB v7x, 128 MiB v6e).
    fits_fused = (4 * slab_bytes + (2 << 20)) <= phys_vmem // 2
    use_fused = fits_fused if force_path is None else (force_path == "fused")

    if use_fused:
        out2 = _eca_fused(x2, conv_w, phys_vmem=phys_vmem)
    else:
        out2 = _eca_split(x2, conv_w, phys_vmem=phys_vmem, c_tile=c_tile)
    return out2.reshape(B, C, H, W)


def eca_reference(x, conv_w):
    # Pure-JAX (f32) reference of the PyTorch forward for verification.
    xf = x.astype(jnp.float32)
    m = jnp.mean(xf, axis=(2, 3))                        # (B, C)
    mp = jnp.pad(m, ((0, 0), (1, 1)))                    # zero-pad channels
    y = (conv_w[0] * mp[:, :-2] + conv_w[1] * mp[:, 1:-1] + conv_w[2] * mp[:, 2:])
    s = jax.nn.sigmoid(y)[:, :, None, None]
    return xf * s


if __name__ == "__main__":
    key = jax.random.PRNGKey(0)
    kx, kw, kx2, kx3 = jax.random.split(key, 4)

    # Conv1d(1, 1, kernel_size=3, bias=False) weight; deterministic uniform
    # init in [-1/sqrt(3), 1/sqrt(3)] (kaiming-uniform-like).
    bound = 1.0 / np.sqrt(3.0)
    conv_w = jax.random.uniform(kw, (3,), dtype=jnp.float32,
                                minval=-bound, maxval=bound)

    # 1) Fused single-pass path, f32, lane-dense spatial (16*16 = 256).
    x = jax.random.normal(kx, (2, 4, 16, 16), dtype=jnp.float32)
    out = jax.block_until_ready(eca_forward(x, conv_w))
    np.testing.assert_allclose(np.asarray(out),
                               np.asarray(eca_reference(x, conv_w)),
                               rtol=1e-5, atol=1e-5)

    # 2) Fused path, bf16 I/O, non-128-multiple spatial (7*7 = 49) streamed
    #    WITHOUT padding (block last dim == full HW).
    xb = jax.random.normal(kx2, (3, 16, 7, 7),
                           dtype=jnp.float32).astype(jnp.bfloat16)
    out_b = jax.block_until_ready(eca_forward(xb, conv_w))
    np.testing.assert_allclose(np.asarray(out_b.astype(jnp.float32)),
                               np.asarray(eca_reference(xb, conv_w)),
                               rtol=3e-2, atol=3e-2)

    # 3) Split (pool -> JAX conv/sigmoid -> gate) path, forced, C-tiled grid.
    xs = jax.random.normal(kx3, (2, 16, 8, 8), dtype=jnp.float32)
    out_s = jax.block_until_ready(
        eca_forward(xs, conv_w, force_path="split", c_tile=8))
    np.testing.assert_allclose(np.asarray(out_s),
                               np.asarray(eca_reference(xs, conv_w)),
                               rtol=1e-5, atol=1e-5)

    print("KERNEL_OK")
</pallas_src>

<mosaic_0001>
module attributes {stable_mosaic.version = 11 : i64} {
  func.func @_eca_fused_kernel(%arg0: i32, %arg1: memref<3xf32, #tpu.memory_space<smem>>, %arg2: memref<1x4x256xf32, #tpu.memory_space<vmem>>, %arg3: memref<1x4x256xf32, #tpu.memory_space<vmem>>) attributes {dimension_semantics = [#tpu.dimension_semantics<parallel>], iteration_bounds = array<i64: 2>, scalar_prefetch = 0 : i64, scratch_operands = 0 : i64, tpu.core_type = #tpu.core_type<tc>, window_params = [{transform_indices = @transform_0, window_bounds = array<i64: 3>}, {transform_indices = @transform_1, window_bounds = array<i64: 1, 4, 256>}, {transform_indices = @transform_2, window_bounds = array<i64: 1, 4, 256>}]} {
    %c0 = arith.constant 0 : index
    %c0_0 = arith.constant 0 : index
    %c0_1 = arith.constant 0 : index
    %0 = vector.load %arg2[%c0, %c0_0, %c0_1] : memref<1x4x256xf32, #tpu.memory_space<vmem>>, vector<1x4x256xf32>
    %1 = vector.shape_cast %0 : vector<1x4x256xf32> to vector<4x256xf32>
    %cst = arith.constant dense<0.000000e+00> : vector<4xf32>
    %2 = vector.multi_reduction <add>, %1, %cst [1] : vector<4x256xf32> to vector<4xf32>
    %3 = vector.shape_cast %2 : vector<4xf32> to vector<4x1xf32>
    %cst_2 = arith.constant 3.906250e-03 : f32
    %4 = vector.broadcast %cst_2 : f32 to vector<4x1xf32>
    %5 = arith.mulf %3, %4 : vector<4x1xf32>
    %cst_3 = arith.constant 0.000000e+00 : f32
    %6 = vector.broadcast %cst_3 : f32 to vector<1x1xf32>
    %7 = tpu.concatenate %6, %5, %6 in 0 : vector<1x1xf32>, vector<4x1xf32>, vector<1x1xf32> -> vector<6x1xf32>
    %c0_4 = arith.constant 0 : index
    %8 = memref.load %arg1[%c0_4] : memref<3xf32, #tpu.memory_space<smem>>
    %9 = vector.extract_strided_slice %7 {offsets = [0, 0], sizes = [4, 1], strides = [1, 1]} : vector<6x1xf32> to vector<4x1xf32>
    %10 = vector.broadcast %8 : f32 to vector<4x1xf32>
    %11 = arith.mulf %10, %9 : vector<4x1xf32>
    %c1 = arith.constant 1 : index
    %12 = memref.load %arg1[%c1] : memref<3xf32, #tpu.memory_space<smem>>
    %13 = vector.broadcast %12 : f32 to vector<4x1xf32>
    %14 = arith.mulf %13, %5 : vector<4x1xf32>
    %15 = arith.addf %11, %14 : vector<4x1xf32>
    %c2 = arith.constant 2 : index
    %16 = memref.load %arg1[%c2] : memref<3xf32, #tpu.memory_space<smem>>
    %17 = vector.extract_strided_slice %7 {offsets = [2, 0], sizes = [4, 1], strides = [1, 1]} : vector<6x1xf32> to vector<4x1xf32>
    %18 = vector.broadcast %16 : f32 to vector<4x1xf32>
    %19 = arith.mulf %18, %17 : vector<4x1xf32>
    %20 = arith.addf %15, %19 : vector<4x1xf32>
    %21 = arith.negf %20 : vector<4x1xf32>
    %22 = math.exp %21 : vector<4x1xf32>
    %cst_5 = arith.constant 1.000000e+00 : f32
    %23 = vector.broadcast %cst_5 : f32 to vector<4x1xf32>
    %24 = arith.addf %23, %22 : vector<4x1xf32>
    %25 = arith.divf %23, %24 : vector<4x1xf32>
    %26 = vector.broadcast %25 : vector<4x1xf32> to vector<4x256xf32>
    %27 = arith.mulf %1, %26 : vector<4x256xf32>
    %c0_6 = arith.constant 0 : index
    %c0_7 = arith.constant 0 : index
    %c0_8 = arith.constant 0 : index
    %28 = vector.load %arg3[%c0_6, %c0_7, %c0_8] : memref<1x4x256xf32, #tpu.memory_space<vmem>>, vector<1x4x256xf32>
    %29 = vector.shape_cast %28 : vector<1x4x256xf32> to vector<4x256xf32>
    %30 = vector.shape_cast %27 : vector<4x256xf32> to vector<1x4x256xf32>
    tpu.vector_store %arg3[%c0_6, %c0_7, %c0_8], %30 {strides = array<i32>} : memref<1x4x256xf32, #tpu.memory_space<vmem>>, vector<1x4x256xf32>,
    return
  }
  func.func @transform_0(%arg0: i32) -> i32 {
    %c0_i32 = arith.constant 0 : i32
    %c0_i32_0 = arith.constant 0 : i32
    return %c0_i32 : i32
  }
  func.func @transform_1(%arg0: i32) -> (i32, i32, i32) {
    %c0_i32 = arith.constant 0 : i32
    %c0_i32_0 = arith.constant 0 : i32
    %c0_i32_1 = arith.constant 0 : i32
    return %arg0, %c0_i32, %c0_i32_0 : i32, i32, i32
  }
  func.func @transform_2(%arg0: i32) -> (i32, i32, i32) {
    %c0_i32 = arith.constant 0 : i32
    %c0_i32_0 = arith.constant 0 : i32
    %c0_i32_1 = arith.constant 0 : i32
    return %arg0, %c0_i32, %c0_i32_0 : i32, i32, i32
  }
}

</mosaic_0001>

<llo_original>
// kernel: tpu_custom_call.1
$region0: #{tpu_custom_call.1}
  #allocation0 [shape = 'u32[]', space=smem, size = 0x4, offset = 0x4, fixed_abs, tag = 'smem constant byte address 0x4 - core index']
  #allocation1 [shape = 'u32[144,128]{1,0:T(1,128)}', space=vmem, size = 0x12000, scoped, tag = 'internal scratch']
  %s0 = inlined_call_operand.hbm [shape: f32[3], index: 0, kind: input, shape index: {}]
  %s1 = inlined_call_operand.hbm [shape: f32[2,4,256], index: 1, kind: input, shape index: {}]
  %s2 = inlined_call_operand.hbm [shape: f32[2,4,256], index: 2, kind: output, shape index: {}]
  %s3 = sld [smem:[#allocation0]]
  $region49: #{tpu_custom_call.1} parent=0
    _
  %s5 = ssub.s32 1, %s3
  %s6 = scalar_select 0, %s5, %s3
  $region1: #{tpu_custom_call.1} parent=0
    #allocation2 [shape = 'u8[512]{0}', space=smem, size = 0x200, scoped, tag = 'input window, operand 0, single buffered']
    #allocation3 [shape = 's32[2]{0}', space=sflag, size = 0x8, scoped, tag = 'scoped memory for tpu_custom_call.1']
    #allocation4 [shape = 's32[2]{0}', space=sflag, size = 0x8, scoped, tag = 'scoped memory for tpu_custom_call.1']
    #allocation5 [shape = 's32[2]{0}', space=sflag, size = 0x8, scoped, tag = 'scoped memory for tpu_custom_call.1']
    #allocation6 [shape = 'u8[8192]{0}', space=vmem, size = 0x2000, scoped, tag = 'input window, operand 1']
    #allocation7 [shape = 'u8[8192]{0}', space=vmem, size = 0x2000, scoped, tag = 'output window, operand 0']
    %7 = vsyncpa [#allocation5], 0
    %8 = vsyncpa [#allocation3], 0
    %s9 = scalar_lea.sflag [#allocation3], 1
    %10 = vsyncpa %s9, 0
    %11 = vsyncpa [#allocation4], 0
    %s12 = scalar_lea.sflag [#allocation4], 1
    %13 = vsyncpa %s12, 0
    loop: start=0, step=1, limit=4
    $region2: #{tpu_custom_call.1} parent=1 // loop_pre_header
      _
    $region3: #{tpu_custom_call.1} parent=1 // loop_header
      %s15 = sphi 0, %s19
      %p16 = scmp.ge.s32.totalorder %s15, 4
      %s23 = sphi 0, %s23
      %s25 = sphi 0, %s23
      %s26 = sphi 0, %s25
      %s40 = sphi 0, %s26
      %s46 = sphi 0, %s48
      %s49 = sphi 0, %s46
      %s50 = sphi 0, %s49
      %s66 = sphi 0, %s50
      %s72 = sphi 0, %s74
      %s75 = sphi 0, %s72
      %s76 = sphi 0, %s75
      %s92 = sphi 0, %s76
    $region4: #{tpu_custom_call.1} parent=1 // loop_header_branch
      %18 = sbr.rel (%p16) target = $region8
    $region5: #{tpu_custom_call.1} parent=1 // loop_body
      %s20 = ssub.s32 %s15, 1
      %s21 = ssub.s32 %s15, 2
      %s22 = sadd.s32 %s15, 1
      %s24 = sadd.s32 %s23, 1
      %p27 = scmp.eq.s32.totalorder %s15, 1
      %p28 = scmp.ne.s32.totalorder %s23, %s25
      %p29 = scmp.eq.s32.totalorder %s15, 0
      %p30 = por %p28, %p29
      %p31 = scmp.ne.s32.totalorder %s23, %s25
      %p32 = scmp.eq.s32.totalorder %s20, 1
      %p33 = por %p31, %p32
      %p34 = scmp.ne.s32.totalorder %s25, %s26
      %p35 = scmp.eq.s32.totalorder %s20, 0
      %p36 = por %p34, %p35
      %p37 = scmp.ne.s32.totalorder %s25, %s26
      %p38 = scmp.eq.s32.totalorder %s21, 1
      %p39 = por %p37, %p38
      %p41 = scmp.ne.s32.totalorder %s26, %s40
      %p42 = scmp.eq.s32.totalorder %s21, 0
      %p43 = por %p41, %p42
      %s44 = ssub.s32 %s15, %s22
      %p45 = scmp.eq.s32.totalorder %s44, 0
      %s47 = sadd.s32 %s46, 1
      %s48 = scalar_select %p45, %s46, %s47
      %p51 = pneg %p45
      %p52 = scmp.eq.s32.totalorder %s15, 1
      %p53 = por %p51, %p52
      %p54 = scmp.ne.s32.totalorder %s46, %s49
      %p55 = scmp.eq.s32.totalorder %s15, 0
      %p56 = por %p54, %p55
      %p57 = scmp.ne.s32.totalorder %s46, %s49
      %p58 = scmp.eq.s32.totalorder %s20, 1
      %p59 = por %p57, %p58
      %p60 = scmp.ne.s32.totalorder %s49, %s50
      %p61 = scmp.eq.s32.totalorder %s20, 0
      %p62 = por %p60, %p61
      %p63 = scmp.ne.s32.totalorder %s49, %s50
      %p64 = scmp.eq.s32.totalorder %s21, 1
      %p65 = por %p63, %p64
      %p67 = scmp.ne.s32.totalorder %s50, %s66
      %p68 = scmp.eq.s32.totalorder %s21, 0
      %p69 = por %p67, %p68
      %s70 = ssub.s32 %s15, %s22
      %p71 = scmp.eq.s32.totalorder %s70, 0
      %s73 = sadd.s32 %s72, 1
      %s74 = scalar_select %p71, %s72, %s73
      %p77 = pneg %p71
      %p78 = scmp.eq.s32.totalorder %s15, 1
      %p79 = por %p77, %p78
      %p80 = scmp.ne.s32.totalorder %s72, %s75
      %p81 = scmp.eq.s32.totalorder %s15, 0
      %p82 = por %p80, %p81
      %p83 = scmp.ne.s32.totalorder %s72, %s75
      %p84 = scmp.eq.s32.totalorder %s20, 1
      %p85 = por %p83, %p84
      %p86 = scmp.ne.s32.totalorder %s75, %s76
      %p87 = scmp.eq.s32.totalorder %s20, 0
      %p88 = por %p86, %p87
      %p89 = scmp.ne.s32.totalorder %s75, %s76
      %p90 = scmp.eq.s32.totalorder %s21, 1
      %p91 = por %p89, %p90
      %p93 = scmp.ne.s32.totalorder %s76, %s92
      %p94 = scmp.eq.s32.totalorder %s21, 0
      %p95 = por %p93, %p94
      %p96 = scmp.le.s32.totalorder 1, %s15
      %p97 = scmp.lt.s32.totalorder %s15, 3
      %p98 = pnand %p96, %p97
      %p99 = pneg %p98
      // Predicated region
      $region9: #{tpu_custom_call.1} parent=5 // pred_check
        _
      $region10: #{tpu_custom_call.1} parent=5 // pred_check_branch
        %101 = sbr.rel (%p98) target = $region12
      $region11: #{tpu_custom_call.1} parent=5 // pred_region
        %s102 = ssub.s32 %s15, 1
        // Predicated region
        $region13: #{tpu_custom_call.1} parent=11 // pred_check
          %p103 = pneg %p36
        $region14: #{tpu_custom_call.1} parent=11 // pred_check_branch
          %105 = sbr.rel (%p103) target = $region16
        $region15: #{tpu_custom_call.1} parent=11 // pred_region
          %s107 = ssub.s32 16, 16
          %108 = vsyncadd [#allocation5], %s107
          %111 = dma.hbm_to_smem %s0, 16, [#allocation2], [#allocation5]
        $region16: #{tpu_custom_call.1} parent=11 // pred_fallthru
          _
      $region12: #{tpu_custom_call.1} parent=5 // pred_fallthru
        _
      %p112 = scmp.lt.s32.totalorder %s15, 2
      // Predicated region
      $region17: #{tpu_custom_call.1} parent=5 // pred_check
        %p113 = pneg %p112
      $region18: #{tpu_custom_call.1} parent=5 // pred_check_branch
        %115 = sbr.rel (%p113) target = $region20
      $region19: #{tpu_custom_call.1} parent=5 // pred_region
        // Predicated region
        $region21: #{tpu_custom_call.1} parent=19 // pred_check
          %p116 = pneg %p56
        $region22: #{tpu_custom_call.1} parent=19 // pred_check_branch
          %118 = sbr.rel (%p116) target = $region24
        $region23: #{tpu_custom_call.1} parent=19 // pred_region
          %s119 = sand.u32 %s46, 1
          %s120 = scalar_lea.sflag [#allocation3], %s119
          %s121 = sand.u32 %s46, 1
          %s122 = smul.addr %s121, 8
          %s123 = scalar_lea.vmem [#allocation6], %s122
          %s125 = ssub.s32 128, 128
          %126 = vsyncadd %s120, %s125
          %s127 = smul.addr %s15, 2
          %s128 = smul.addr %s127, 64
          %s129 = scalar_lea.hbm %s1, %s128
          %s131 = sshll.u32 %s123, 4
          %s132 = int_to_ptr.vmem [resolvable:$true] %s131
          %134 = dma.hbm_to_vmem [thread:$0]  %s129, 128, %s132, %s120
        $region24: #{tpu_custom_call.1} parent=19 // pred_fallthru
          _
      $region20: #{tpu_custom_call.1} parent=5 // pred_fallthru
        _
      %p135 = scmp.le.s32.totalorder 1, %s15
      %p136 = scmp.lt.s32.totalorder %s15, 3
      %p137 = pnand %p135, %p136
      %p138 = pneg %p137
      // Predicated region
      $region25: #{tpu_custom_call.1} parent=5 // pred_check
        _
      $region26: #{tpu_custom_call.1} parent=5 // pred_check_branch
        %140 = sbr.rel (%p137) target = $region28
      $region27: #{tpu_custom_call.1} parent=5 // pred_region
        %s141 = ssub.s32 %s15, 1
        // Predicated region
        $region29: #{tpu_custom_call.1} parent=27 // pred_check
          %p142 = pneg %p36
        $region30: #{tpu_custom_call.1} parent=27 // pred_check_branch
          %144 = sbr.rel (%p142) target = $region32
        $region31: #{tpu_custom_call.1} parent=27 // pred_region
          %145 = dma.done [#allocation5], 16
        $region32: #{tpu_custom_call.1} parent=27 // pred_fallthru
          _
        %s146 = sand.u32 %s49, 1
        %s147 = scalar_lea.sflag [#allocation3], %s146
        %s148 = sand.u32 %s49, 1
        %s149 = smul.addr %s148, 8
        %s150 = scalar_lea.vmem [#allocation6], %s149
        // Predicated region
        $region33: #{tpu_custom_call.1} parent=27 // pred_check
          %p151 = pneg %p62
        $region34: #{tpu_custom_call.1} parent=27 // pred_check_branch
          %153 = sbr.rel (%p151) target = $region36
        $region35: #{tpu_custom_call.1} parent=27 // pred_region
          %154 = dma.done %s147, 128
        $region36: #{tpu_custom_call.1} parent=27 // pred_fallthru
          _
        %155 = sfence
        %p156 = pneg %p36
        %p157 = pneg %p33
        %s158 = sand.u32 %s49, 1
        %s159 = scalar_lea.sflag [#allocation3], %s158
        %s160 = sand.u32 %s49, 1
        %s161 = smul.addr %s160, 8
        %s162 = scalar_lea.vmem [#allocation6], %s161
        %p163 = pneg %p62
        %p164 = pneg %p59
        %p165 = pneg %p88
        %p166 = pneg %p85
        %s167 = sand.u32 %s75, 1
        %s168 = scalar_lea.sflag [#allocation4], %s167
        %s169 = sand.u32 %s75, 1
        %s170 = smul.addr %s169, 8
        %s171 = scalar_lea.vmem [#allocation7], %s170
        %v172 = vld [vmem:[%s150] sm:$0xff]
        %v174 = vcombine.high %v172, %v172
        %vm176 = vcmask 1043456
        %v177 = vsel %vm176, %v172, 0.0
        %v178 = vsel %vm176, %v174, 0.0
        %v179 = vadd.f32 %v177, %v178
        %180 = vadd.xlane.f32.xlu0 %v179
        %v181 = vpop.xlane.xlu0 %180
        %v182 = vmul.f32 %v181, 0.00390625
        %v184 = vrot.slane %v182, 7
        %vm186 = vcmask 1040384
        %v187 = vsel %vm186, 0.0, %v184
        %vm188 = vcmask 1044480
        %v189 = vsel %vm188, %v187, 0.0
        %s190 = sld [smem:[#allocation2]]
        %v191 = vstv %s190
        %v192 = vmul.f32 %v191, %v189
        %s193 = sld [smem:[#allocation2 + $0x1]]
        %v194 = vstv %s193
        %v195 = vmul.f32 %v194, %v182
        %v196 = vadd.f32 %v192, %v195
        %s197 = sld [smem:[#allocation2 + $0x2]]
        %v198 = vstv %s197
        %v199 = vmul.f32 %v198, %v189
        %v201 = vrot.slane %v199, 2
        %v203 = vadd.f32 %v196, %v201
        %v204 = vxor.u32 %v203, 2147483648
        %v205 = vmul.f32 %v204, 1.442695
        %v206 = vpow.pop %v205
        %v207 = vadd.f32 %v206, 1.0
        %v208 = vrcp.pop %v207
        %v209 = vmul.f32 1.0, %v208
        %211 = vset.pattern.permute.xlu0 0
        %212 = vperm.xlu0 %211, %v209
        %v213 = vpop.permute.xlu0 %212
        %v215 = vunpack.c.l.s4 839922192
        %v216 = vunpack.c.0.s8 %v215
        %v217 = vlaneseq
        %v218 = vshrl.u32 %v217, 7
        %v219 = vsub.s32 %v216, %v218
        %v220 = vrot.slane %v213, %v219
        %v222 = vmul.f32 %v172, %v220
        %223 = vst [vmem:[%s171] sm:$0xff] %v222
        %s224 = sand.u32 %s75, 1
        %s225 = scalar_lea.sflag [#allocation4], %s224
        %s226 = sand.u32 %s75, 1
        %s227 = smul.addr %s226, 8
        %s228 = scalar_lea.vmem [#allocation7], %s227
        // Predicated region
        $region37: #{tpu_custom_call.1} parent=27 // pred_check
          %p229 = pneg %p85
        $region38: #{tpu_custom_call.1} parent=27 // pred_check_branch
          %231 = sbr.rel (%p229) target = $region40
        $region39: #{tpu_custom_call.1} parent=27 // pred_region
          %s233 = ssub.s32 128, 128
          %234 = vsyncadd %s225, %s233
          %s235 = smul.addr %s20, 2
          %s236 = smul.addr %s235, 64
          %s237 = scalar_lea.hbm %s2, %s236
          %s239 = sshll.u32 %s228, 4
          %s240 = int_to_ptr.vmem [resolvable:$true] %s239
          %242 = dma.vmem_to_hbm [thread:$0]  %s240, 128, %s237, %s225
        $region40: #{tpu_custom_call.1} parent=27 // pred_fallthru
          _
      $region28: #{tpu_custom_call.1} parent=5 // pred_fallthru
        _
      %p243 = scmp.le.s32.totalorder 2, %s15
      // Predicated region
      $region41: #{tpu_custom_call.1} parent=5 // pred_check
        %p244 = pneg %p243
      $region42: #{tpu_custom_call.1} parent=5 // pred_check_branch
        %246 = sbr.rel (%p244) target = $region44
      $region43: #{tpu_custom_call.1} parent=5 // pred_region
        %s247 = ssub.s32 %s15, 2
        // Predicated region
        $region45: #{tpu_custom_call.1} parent=43 // pred_check
          %p248 = pneg %p91
        $region46: #{tpu_custom_call.1} parent=43 // pred_check_branch
          %250 = sbr.rel (%p248) target = $region48
        $region47: #{tpu_custom_call.1} parent=43 // pred_region
          %s251 = sand.u32 %s76, 1
          %s252 = scalar_lea.sflag [#allocation4], %s251
          %s253 = sand.u32 %s76, 1
          %s254 = smul.addr %s253, 8
          %s255 = scalar_lea.vmem [#allocation7], %s254
          %256 = dma.done %s252, 128
        $region48: #{tpu_custom_call.1} parent=43 // pred_fallthru
          _
      $region44: #{tpu_custom_call.1} parent=5 // pred_fallthru
        _
    $region6: #{tpu_custom_call.1} parent=1 // loop_footer
      %s19 = sadd.s32 1, %s15
    $region7: #{tpu_custom_call.1} parent=1 // loop_footer_branch
      %14 = sbr.rel target = $region3
    $region8: #{tpu_custom_call.1} parent=1 // loop_exit
      _
    %257 = vsyncpa [#allocation3], 1
    %s258 = scalar_lea.sflag [#allocation3], 1
    %259 = vsyncpa %s258, 1
    %260 = vsyncpa [#allocation4], 1
    %s261 = scalar_lea.sflag [#allocation4], 1
    %262 = vsyncpa %s261, 1
    %263 = vsyncpa [#allocation5], 1
    %s264 = scalar_lea.sflag [#allocation5], 1
    %265 = vsyncpa %s264, 1

</llo_original>
